<compile_context>
chip_gen: v7x
topology: tpu7x:2x2x1
jax: 0.10.0
libtpu: 0.0.40
codegen_flags: <defaults>
</compile_context>

<pallas_src>
import jax
import jax.numpy as jnp
from jax.experimental import pallas as pl
from jax.experimental.pallas import tpu as pltpu

EPS = 1e-3  # BatchNorm2d eps=0.001


def _bn_relu_dwconv_kernel(x_ee_ref, x_eo_ref, x_oe_ref, x_oo_ref,
                           g_ref, b_ref, w_ref, o_ref):
    # x_pp refs: (N, Hh, Wh, C) parity planes of the (channel-padded) NHWC input.
    N, Hh, Wh, C = x_ee_ref.shape
    cnt = float(4 * N * Hh * Wh)  # = N*H*W elements per channel

    x_ee = x_ee_ref[...]
    x_eo = x_eo_ref[...]
    x_oe = x_oe_ref[...]
    x_oo = x_oo_ref[...]

    # ---- BatchNorm batch statistics, ONE pass: sum and sum-of-squares ----
    t = x_ee + x_eo + x_oe + x_oo
    tsq = x_ee * x_ee + x_eo * x_eo + x_oe * x_oe + x_oo * x_oo
    s = jnp.sum(t, axis=(0, 1, 2), keepdims=True)      # (1,1,1,C)
    ss = jnp.sum(tsq, axis=(0, 1, 2), keepdims=True)   # (1,1,1,C)
    mean = s / cnt
    var = jnp.maximum(ss / cnt - mean * mean, 0.0)      # biased variance

    gamma = g_ref[...].reshape(1, 1, 1, C)
    beta = b_ref[...].reshape(1, 1, 1, C)
    scale = gamma * jax.lax.rsqrt(var + EPS)
    shift = beta - mean * scale

    def bn_relu(v):
        return jnp.maximum(v * scale + shift, 0.0)

    y_ee = bn_relu(x_ee)
    y_eo = bn_relu(x_eo)
    y_oe = bn_relu(x_oe)
    y_oo = bn_relu(x_oo)

    # ---- kw = 0 taps: need input column iw = 2*ow - 1, i.e. the odd-W plane
    # shifted by one output column.  Do it with an XLU sublane roll and zero
    # the wrapped-around first column (left "same" padding). ----
    col = jax.lax.broadcasted_iota(jnp.int32, (1, 1, Wh, C), 2)
    y_eo_w = jnp.where(col > 0, pltpu.roll(y_eo, 1, 2), 0.0)
    y_oo_w = jnp.where(col > 0, pltpu.roll(y_oo, 1, 2), 0.0)

    w_all = w_ref[...]  # (3, 3, 1, C)

    def wk(kh, kw):
        return w_all[kh, kw].reshape(1, 1, 1, C)

    # ---- depthwise 3x3, stride 2, pad 1 as 9 MACs on the parity planes ----
    # taps with kh in {1,2} (no H shift): contribute to every output row.
    part = (y_ee * wk(1, 1) + y_eo * wk(1, 2) + y_eo_w * wk(1, 0)
            + y_oe * wk(2, 1) + y_oo * wk(2, 2) + y_oo_w * wk(2, 0))

    if Hh > 1:
        # taps with kh = 0 (input row ih = 2*oh - 1): output row oh (>=1)
        # reads odd-H plane row oh-1; output row 0 sees the zero top padding.
        part_sh = (y_oe[:, :Hh - 1, :, :] * wk(0, 1)
                   + y_oo[:, :Hh - 1, :, :] * wk(0, 2)
                   + y_oo_w[:, :Hh - 1, :, :] * wk(0, 0))
        o_ref[:, 0:1, :, :] = part[:, 0:1, :, :]
        o_ref[:, 1:, :, :] = part[:, 1:, :, :] + part_sh
    else:
        o_ref[...] = part


@jax.jit
def bn_relu_dwconv(x_nchw, gamma, beta, w):
    """x_nchw: (N,C,H,W) f32; gamma,beta: (C,); w: (C,1,3,3) depthwise weights."""
    N, C, H, W = x_nchw.shape
    assert H % 2 == 0 and W % 2 == 0, "even spatial dims expected (stride-2 parity split)"
    Hh, Wh = H // 2, W // 2
    Cp = ((C + 127) // 128) * 128   # lane-pad channels to a multiple of 128
    pc = Cp - C

    # NCHW -> NHWC, channel pad, stride-2 parity split: wrapper glue only,
    # fused by XLA under jit so the planes are built straight from the input.
    x = jnp.transpose(x_nchw, (0, 2, 3, 1)).astype(jnp.float32)
    if pc:
        x = jnp.pad(x, ((0, 0), (0, 0), (0, 0), (0, pc)))
    x_ee = x[:, 0::2, 0::2, :]
    x_eo = x[:, 0::2, 1::2, :]
    x_oe = x[:, 1::2, 0::2, :]
    x_oo = x[:, 1::2, 1::2, :]

    g = jnp.pad(gamma.astype(jnp.float32), (0, pc), constant_values=1.0).reshape(1, Cp)
    b = jnp.pad(beta.astype(jnp.float32), (0, pc)).reshape(1, Cp)
    wk = jnp.transpose(w.reshape(C, 3, 3), (1, 2, 0)).astype(jnp.float32)   # (3,3,C)
    wk = jnp.pad(wk, ((0, 0), (0, 0), (0, pc))).reshape(3, 3, 1, Cp)

    vmem = pl.BlockSpec(memory_space=pltpu.MemorySpace.VMEM)
    out_nhwc = pl.pallas_call(
        _bn_relu_dwconv_kernel,
        out_shape=jax.ShapeDtypeStruct((N, Hh, Wh, Cp), jnp.float32),
        in_specs=[vmem] * 7,
        out_specs=vmem,
        compiler_params=pltpu.CompilerParams(vmem_limit_bytes=48 * 1024 * 1024),
    )(x_ee, x_eo, x_oe, x_oo, g, b, wk)

    # drop channel padding, NHWC -> NCHW to match PyTorch output convention.
    return jnp.transpose(out_nhwc[..., :C], (0, 3, 1, 2))


if __name__ == "__main__":
    key = jax.random.PRNGKey(0)
    k1, k2, k3, k4 = jax.random.split(key, 4)

    # Small shapes consistent with the module: C must be 96 (fixed params),
    # spatial reduced from 112 -> 16 for the demo.
    N, C, H, W = 1, 96, 16, 16
    x = jax.random.normal(k1, (N, C, H, W), jnp.float32)
    gamma = 1.0 + 0.1 * jax.random.normal(k2, (C,), jnp.float32)
    beta = 0.1 * jax.random.normal(k3, (C,), jnp.float32)
    w = 0.2 * jax.random.normal(k4, (C, 1, 3, 3), jnp.float32)  # depthwise, groups=C, no bias

    out = jax.block_until_ready(bn_relu_dwconv(x, gamma, beta, w))

    # Plain-JAX reference (training-mode BatchNorm -> ReLU -> depthwise conv).
    mean = jnp.mean(x, axis=(0, 2, 3), keepdims=True)
    var = jnp.mean((x - mean) ** 2, axis=(0, 2, 3), keepdims=True)
    y = (x - mean) * jax.lax.rsqrt(var + EPS)
    y = y * gamma.reshape(1, C, 1, 1) + beta.reshape(1, C, 1, 1)
    y = jnp.maximum(y, 0.0)
    ref = jax.lax.conv_general_dilated(
        y, w, window_strides=(2, 2), padding=((1, 1), (1, 1)),
        dimension_numbers=("NCHW", "OIHW", "NCHW"), feature_group_count=C)

    assert out.shape == ref.shape == (N, C, H // 2, W // 2)
    err = float(jnp.max(jnp.abs(out - ref)))
    assert err < 1e-3, f"max abs error {err}"
    print("KERNEL_OK")
</pallas_src>

<mosaic_0001>
module attributes {stable_mosaic.version = 11 : i64} {
  func.func @_bn_relu_dwconv_kernel(%arg0: memref<1x8x8x128xf32, #tpu.memory_space<vmem>>, %arg1: memref<1x8x8x128xf32, #tpu.memory_space<vmem>>, %arg2: memref<1x8x8x128xf32, #tpu.memory_space<vmem>>, %arg3: memref<1x8x8x128xf32, #tpu.memory_space<vmem>>, %arg4: memref<1x128xf32, #tpu.memory_space<vmem>>, %arg5: memref<1x128xf32, #tpu.memory_space<vmem>>, %arg6: memref<3x3x1x128xf32, #tpu.memory_space<vmem>>, %arg7: memref<1x8x8x128xf32, #tpu.memory_space<vmem>>) attributes {dimension_semantics = [], scalar_prefetch = 0 : i64, scratch_operands = 0 : i64, tpu.core_type = #tpu.core_type<tc>} {
    %c0 = arith.constant 0 : index
    %c0_0 = arith.constant 0 : index
    %c0_1 = arith.constant 0 : index
    %c0_2 = arith.constant 0 : index
    %0 = vector.load %arg0[%c0, %c0_0, %c0_1, %c0_2] : memref<1x8x8x128xf32, #tpu.memory_space<vmem>>, vector<1x8x8x128xf32>
    %c0_3 = arith.constant 0 : index
    %c0_4 = arith.constant 0 : index
    %c0_5 = arith.constant 0 : index
    %c0_6 = arith.constant 0 : index
    %1 = vector.load %arg1[%c0_3, %c0_4, %c0_5, %c0_6] : memref<1x8x8x128xf32, #tpu.memory_space<vmem>>, vector<1x8x8x128xf32>
    %c0_7 = arith.constant 0 : index
    %c0_8 = arith.constant 0 : index
    %c0_9 = arith.constant 0 : index
    %c0_10 = arith.constant 0 : index
    %2 = vector.load %arg2[%c0_7, %c0_8, %c0_9, %c0_10] : memref<1x8x8x128xf32, #tpu.memory_space<vmem>>, vector<1x8x8x128xf32>
    %c0_11 = arith.constant 0 : index
    %c0_12 = arith.constant 0 : index
    %c0_13 = arith.constant 0 : index
    %c0_14 = arith.constant 0 : index
    %3 = vector.load %arg3[%c0_11, %c0_12, %c0_13, %c0_14] : memref<1x8x8x128xf32, #tpu.memory_space<vmem>>, vector<1x8x8x128xf32>
    %4 = arith.addf %0, %1 : vector<1x8x8x128xf32>
    %5 = arith.addf %4, %2 : vector<1x8x8x128xf32>
    %6 = arith.addf %5, %3 : vector<1x8x8x128xf32>
    %7 = arith.mulf %0, %0 : vector<1x8x8x128xf32>
    %8 = arith.mulf %1, %1 : vector<1x8x8x128xf32>
    %9 = arith.addf %7, %8 : vector<1x8x8x128xf32>
    %10 = arith.mulf %2, %2 : vector<1x8x8x128xf32>
    %11 = arith.addf %9, %10 : vector<1x8x8x128xf32>
    %12 = arith.mulf %3, %3 : vector<1x8x8x128xf32>
    %13 = arith.addf %11, %12 : vector<1x8x8x128xf32>
    %cst = arith.constant dense<0.000000e+00> : vector<128xf32>
    %14 = vector.multi_reduction <add>, %6, %cst [0, 1, 2] : vector<1x8x8x128xf32> to vector<128xf32>
    %15 = vector.shape_cast %14 : vector<128xf32> to vector<1x1x1x128xf32>
    %cst_15 = arith.constant dense<0.000000e+00> : vector<128xf32>
    %16 = vector.multi_reduction <add>, %13, %cst_15 [0, 1, 2] : vector<1x8x8x128xf32> to vector<128xf32>
    %17 = vector.shape_cast %16 : vector<128xf32> to vector<1x1x1x128xf32>
    %cst_16 = arith.constant 2.560000e+02 : f32
    %18 = vector.broadcast %cst_16 : f32 to vector<1x1x1x128xf32>
    %19 = arith.divf %15, %18 : vector<1x1x1x128xf32>
    %cst_17 = arith.constant 2.560000e+02 : f32
    %20 = vector.broadcast %cst_17 : f32 to vector<1x1x1x128xf32>
    %21 = arith.divf %17, %20 : vector<1x1x1x128xf32>
    %22 = arith.mulf %19, %19 : vector<1x1x1x128xf32>
    %23 = arith.subf %21, %22 : vector<1x1x1x128xf32>
    %cst_18 = arith.constant 0.000000e+00 : f32
    %24 = vector.broadcast %cst_18 : f32 to vector<1x1x1x128xf32>
    %25 = arith.maximumf %23, %24 : vector<1x1x1x128xf32>
    %c0_19 = arith.constant 0 : index
    %c0_20 = arith.constant 0 : index
    %26 = vector.load %arg4[%c0_19, %c0_20] : memref<1x128xf32, #tpu.memory_space<vmem>>, vector<1x128xf32>
    %27 = vector.shape_cast %26 : vector<1x128xf32> to vector<1x1x1x128xf32>
    %c0_21 = arith.constant 0 : index
    %c0_22 = arith.constant 0 : index
    %28 = vector.load %arg5[%c0_21, %c0_22] : memref<1x128xf32, #tpu.memory_space<vmem>>, vector<1x128xf32>
    %29 = vector.shape_cast %28 : vector<1x128xf32> to vector<1x1x1x128xf32>
    %cst_23 = arith.constant 1.000000e-03 : f32
    %30 = vector.broadcast %cst_23 : f32 to vector<1x1x1x128xf32>
    %31 = arith.addf %25, %30 : vector<1x1x1x128xf32>
    %32 = math.rsqrt %31 : vector<1x1x1x128xf32>
    %33 = arith.mulf %27, %32 : vector<1x1x1x128xf32>
    %34 = arith.mulf %19, %33 : vector<1x1x1x128xf32>
    %35 = arith.subf %29, %34 : vector<1x1x1x128xf32>
    %36 = vector.broadcast %33 : vector<1x1x1x128xf32> to vector<1x8x8x128xf32>
    %37 = arith.mulf %0, %36 : vector<1x8x8x128xf32>
    %38 = vector.broadcast %35 : vector<1x1x1x128xf32> to vector<1x8x8x128xf32>
    %39 = arith.addf %37, %38 : vector<1x8x8x128xf32>
    %cst_24 = arith.constant 0.000000e+00 : f32
    %40 = vector.broadcast %cst_24 : f32 to vector<1x8x8x128xf32>
    %41 = arith.maximumf %39, %40 : vector<1x8x8x128xf32>
    %42 = vector.broadcast %33 : vector<1x1x1x128xf32> to vector<1x8x8x128xf32>
    %43 = arith.mulf %1, %42 : vector<1x8x8x128xf32>
    %44 = vector.broadcast %35 : vector<1x1x1x128xf32> to vector<1x8x8x128xf32>
    %45 = arith.addf %43, %44 : vector<1x8x8x128xf32>
    %cst_25 = arith.constant 0.000000e+00 : f32
    %46 = vector.broadcast %cst_25 : f32 to vector<1x8x8x128xf32>
    %47 = arith.maximumf %45, %46 : vector<1x8x8x128xf32>
    %48 = vector.broadcast %33 : vector<1x1x1x128xf32> to vector<1x8x8x128xf32>
    %49 = arith.mulf %2, %48 : vector<1x8x8x128xf32>
    %50 = vector.broadcast %35 : vector<1x1x1x128xf32> to vector<1x8x8x128xf32>
    %51 = arith.addf %49, %50 : vector<1x8x8x128xf32>
    %cst_26 = arith.constant 0.000000e+00 : f32
    %52 = vector.broadcast %cst_26 : f32 to vector<1x8x8x128xf32>
    %53 = arith.maximumf %51, %52 : vector<1x8x8x128xf32>
    %54 = vector.broadcast %33 : vector<1x1x1x128xf32> to vector<1x8x8x128xf32>
    %55 = arith.mulf %3, %54 : vector<1x8x8x128xf32>
    %56 = vector.broadcast %35 : vector<1x1x1x128xf32> to vector<1x8x8x128xf32>
    %57 = arith.addf %55, %56 : vector<1x8x8x128xf32>
    %cst_27 = arith.constant 0.000000e+00 : f32
    %58 = vector.broadcast %cst_27 : f32 to vector<1x8x8x128xf32>
    %59 = arith.maximumf %57, %58 : vector<1x8x8x128xf32>
    %60 = tpu.iota {dimensions = array<i32: 2>} : vector<1x1x8x128xi32>
    %c0_i32 = arith.constant 0 : i32
    %61 = vector.broadcast %c0_i32 : i32 to vector<1x1x8x128xi32>
    %62 = arith.cmpi sgt, %60, %61 : vector<1x1x8x128xi32>
    %c1_i32 = arith.constant 1 : i32
    %63 = tpu.dynamic_rotate %47 by %c1_i32 dim 2 : vector<1x8x8x128xf32>, i32 -> vector<1x8x8x128xf32>
    %cst_28 = arith.constant 0.000000e+00 : f32
    %64 = vector.shape_cast %62 : vector<1x1x8x128xi1> to vector<1x1x8x128xi1>
    %65 = vector.broadcast %64 : vector<1x1x8x128xi1> to vector<1x8x8x128xi1>
    %66 = vector.broadcast %cst_28 : f32 to vector<1x8x8x128xf32>
    %67 = arith.select %65, %63, %66 : vector<1x8x8x128xi1>, vector<1x8x8x128xf32>
    %c0_i32_29 = arith.constant 0 : i32
    %68 = vector.broadcast %c0_i32_29 : i32 to vector<1x1x8x128xi32>
    %69 = arith.cmpi sgt, %60, %68 : vector<1x1x8x128xi32>
    %c1_i32_30 = arith.constant 1 : i32
    %70 = tpu.dynamic_rotate %59 by %c1_i32_30 dim 2 : vector<1x8x8x128xf32>, i32 -> vector<1x8x8x128xf32>
    %cst_31 = arith.constant 0.000000e+00 : f32
    %71 = vector.shape_cast %69 : vector<1x1x8x128xi1> to vector<1x1x8x128xi1>
    %72 = vector.broadcast %71 : vector<1x1x8x128xi1> to vector<1x8x8x128xi1>
    %73 = vector.broadcast %cst_31 : f32 to vector<1x8x8x128xf32>
    %74 = arith.select %72, %70, %73 : vector<1x8x8x128xi1>, vector<1x8x8x128xf32>
    %c0_32 = arith.constant 0 : index
    %c0_33 = arith.constant 0 : index
    %c0_34 = arith.constant 0 : index
    %c0_35 = arith.constant 0 : index
    %75 = vector.load %arg6[%c0_32, %c0_33, %c0_34, %c0_35] : memref<3x3x1x128xf32, #tpu.memory_space<vmem>>, vector<3x3x1x128xf32>
    %76 = vector.extract_strided_slice %75 {offsets = [1, 1, 0, 0], sizes = [1, 1, 1, 128], strides = [1, 1, 1, 1]} : vector<3x3x1x128xf32> to vector<1x1x1x128xf32>
    %77 = vector.shape_cast %76 : vector<1x1x1x128xf32> to vector<1x128xf32>
    %78 = vector.shape_cast %77 : vector<1x128xf32> to vector<1x1x1x128xf32>
    %79 = vector.broadcast %78 : vector<1x1x1x128xf32> to vector<1x8x8x128xf32>
    %80 = arith.mulf %41, %79 : vector<1x8x8x128xf32>
    %81 = vector.extract_strided_slice %75 {offsets = [1, 2, 0, 0], sizes = [1, 1, 1, 128], strides = [1, 1, 1, 1]} : vector<3x3x1x128xf32> to vector<1x1x1x128xf32>
    %82 = vector.shape_cast %81 : vector<1x1x1x128xf32> to vector<1x128xf32>
    %83 = vector.shape_cast %82 : vector<1x128xf32> to vector<1x1x1x128xf32>
    %84 = vector.broadcast %83 : vector<1x1x1x128xf32> to vector<1x8x8x128xf32>
    %85 = arith.mulf %47, %84 : vector<1x8x8x128xf32>
    %86 = arith.addf %80, %85 : vector<1x8x8x128xf32>
    %87 = vector.extract_strided_slice %75 {offsets = [1, 0, 0, 0], sizes = [1, 1, 1, 128], strides = [1, 1, 1, 1]} : vector<3x3x1x128xf32> to vector<1x1x1x128xf32>
    %88 = vector.shape_cast %87 : vector<1x1x1x128xf32> to vector<1x128xf32>
    %89 = vector.shape_cast %88 : vector<1x128xf32> to vector<1x1x1x128xf32>
    %90 = vector.broadcast %89 : vector<1x1x1x128xf32> to vector<1x8x8x128xf32>
    %91 = arith.mulf %67, %90 : vector<1x8x8x128xf32>
    %92 = arith.addf %86, %91 : vector<1x8x8x128xf32>
    %93 = vector.extract_strided_slice %75 {offsets = [2, 1, 0, 0], sizes = [1, 1, 1, 128], strides = [1, 1, 1, 1]} : vector<3x3x1x128xf32> to vector<1x1x1x128xf32>
    %94 = vector.shape_cast %93 : vector<1x1x1x128xf32> to vector<1x128xf32>
    %95 = vector.shape_cast %94 : vector<1x128xf32> to vector<1x1x1x128xf32>
    %96 = vector.broadcast %95 : vector<1x1x1x128xf32> to vector<1x8x8x128xf32>
    %97 = arith.mulf %53, %96 : vector<1x8x8x128xf32>
    %98 = arith.addf %92, %97 : vector<1x8x8x128xf32>
    %99 = vector.extract_strided_slice %75 {offsets = [2, 2, 0, 0], sizes = [1, 1, 1, 128], strides = [1, 1, 1, 1]} : vector<3x3x1x128xf32> to vector<1x1x1x128xf32>
    %100 = vector.shape_cast %99 : vector<1x1x1x128xf32> to vector<1x128xf32>
    %101 = vector.shape_cast %100 : vector<1x128xf32> to vector<1x1x1x128xf32>
    %102 = vector.broadcast %101 : vector<1x1x1x128xf32> to vector<1x8x8x128xf32>
    %103 = arith.mulf %59, %102 : vector<1x8x8x128xf32>
    %104 = arith.addf %98, %103 : vector<1x8x8x128xf32>
    %105 = vector.extract_strided_slice %75 {offsets = [2, 0, 0, 0], sizes = [1, 1, 1, 128], strides = [1, 1, 1, 1]} : vector<3x3x1x128xf32> to vector<1x1x1x128xf32>
    %106 = vector.shape_cast %105 : vector<1x1x1x128xf32> to vector<1x128xf32>
    %107 = vector.shape_cast %106 : vector<1x128xf32> to vector<1x1x1x128xf32>
    %108 = vector.broadcast %107 : vector<1x1x1x128xf32> to vector<1x8x8x128xf32>
    %109 = arith.mulf %74, %108 : vector<1x8x8x128xf32>
    %110 = arith.addf %104, %109 : vector<1x8x8x128xf32>
    %111 = vector.extract_strided_slice %53 {offsets = [0, 0, 0, 0], sizes = [1, 7, 8, 128], strides = [1, 1, 1, 1]} : vector<1x8x8x128xf32> to vector<1x7x8x128xf32>
    %112 = vector.extract_strided_slice %75 {offsets = [0, 1, 0, 0], sizes = [1, 1, 1, 128], strides = [1, 1, 1, 1]} : vector<3x3x1x128xf32> to vector<1x1x1x128xf32>
    %113 = vector.shape_cast %112 : vector<1x1x1x128xf32> to vector<1x128xf32>
    %114 = vector.shape_cast %113 : vector<1x128xf32> to vector<1x1x1x128xf32>
    %115 = vector.broadcast %114 : vector<1x1x1x128xf32> to vector<1x7x8x128xf32>
    %116 = arith.mulf %111, %115 : vector<1x7x8x128xf32>
    %117 = vector.extract_strided_slice %59 {offsets = [0, 0, 0, 0], sizes = [1, 7, 8, 128], strides = [1, 1, 1, 1]} : vector<1x8x8x128xf32> to vector<1x7x8x128xf32>
    %118 = vector.extract_strided_slice %75 {offsets = [0, 2, 0, 0], sizes = [1, 1, 1, 128], strides = [1, 1, 1, 1]} : vector<3x3x1x128xf32> to vector<1x1x1x128xf32>
    %119 = vector.shape_cast %118 : vector<1x1x1x128xf32> to vector<1x128xf32>
    %120 = vector.shape_cast %119 : vector<1x128xf32> to vector<1x1x1x128xf32>
    %121 = vector.broadcast %120 : vector<1x1x1x128xf32> to vector<1x7x8x128xf32>
    %122 = arith.mulf %117, %121 : vector<1x7x8x128xf32>
    %123 = arith.addf %116, %122 : vector<1x7x8x128xf32>
    %124 = vector.extract_strided_slice %74 {offsets = [0, 0, 0, 0], sizes = [1, 7, 8, 128], strides = [1, 1, 1, 1]} : vector<1x8x8x128xf32> to vector<1x7x8x128xf32>
    %125 = vector.extract_strided_slice %75 {offsets = [0, 0, 0, 0], sizes = [1, 1, 1, 128], strides = [1, 1, 1, 1]} : vector<3x3x1x128xf32> to vector<1x1x1x128xf32>
    %126 = vector.shape_cast %125 : vector<1x1x1x128xf32> to vector<1x128xf32>
    %127 = vector.shape_cast %126 : vector<1x128xf32> to vector<1x1x1x128xf32>
    %128 = vector.broadcast %127 : vector<1x1x1x128xf32> to vector<1x7x8x128xf32>
    %129 = arith.mulf %124, %128 : vector<1x7x8x128xf32>
    %130 = arith.addf %123, %129 : vector<1x7x8x128xf32>
    %131 = vector.extract_strided_slice %110 {offsets = [0, 0, 0, 0], sizes = [1, 1, 8, 128], strides = [1, 1, 1, 1]} : vector<1x8x8x128xf32> to vector<1x1x8x128xf32>
    %c0_36 = arith.constant 0 : index
    %c0_37 = arith.constant 0 : index
    %c0_38 = arith.constant 0 : index
    %c0_39 = arith.constant 0 : index
    %132 = vector.load %arg7[%c0_36, %c0_37, %c0_38, %c0_39] : memref<1x8x8x128xf32, #tpu.memory_space<vmem>>, vector<1x1x8x128xf32>
    tpu.vector_store %arg7[%c0_36, %c0_37, %c0_38, %c0_39], %131 {strides = array<i32>} : memref<1x8x8x128xf32, #tpu.memory_space<vmem>>, vector<1x1x8x128xf32>,
    %133 = vector.extract_strided_slice %110 {offsets = [0, 1, 0, 0], sizes = [1, 7, 8, 128], strides = [1, 1, 1, 1]} : vector<1x8x8x128xf32> to vector<1x7x8x128xf32>
    %134 = arith.addf %133, %130 : vector<1x7x8x128xf32>
    %c0_40 = arith.constant 0 : index
    %c1 = arith.constant 1 : index
    %c0_41 = arith.constant 0 : index
    %c0_42 = arith.constant 0 : index
    %135 = vector.load %arg7[%c0_40, %c1, %c0_41, %c0_42] : memref<1x8x8x128xf32, #tpu.memory_space<vmem>>, vector<1x7x8x128xf32>
    tpu.vector_store %arg7[%c0_40, %c1, %c0_41, %c0_42], %134 {strides = array<i32>} : memref<1x8x8x128xf32, #tpu.memory_space<vmem>>, vector<1x7x8x128xf32>,
    return
  }
}

</mosaic_0001>

<llo_original>
// kernel: bn_relu_dwconv.1
$region0: #{bn_relu_dwconv.1}
  #allocation0 [shape = 'u32[]', space=smem, size = 0x4, offset = 0x4, fixed_abs, tag = 'smem constant byte address 0x4 - core index']
  #allocation1 [shape = 'u32[144,128]{1,0:T(1,128)}', space=vmem, size = 0x12000, scoped, tag = 'internal scratch']
  %s0 = inlined_call_operand.vmem [shape: f32[1,8,8,128], index: 0, kind: input, shape index: {}]
  %s1 = inlined_call_operand.vmem [shape: f32[1,8,8,128], index: 1, kind: input, shape index: {}]
  %s2 = inlined_call_operand.vmem [shape: f32[1,8,8,128], index: 2, kind: input, shape index: {}]
  %s3 = inlined_call_operand.vmem [shape: f32[1,8,8,128], index: 3, kind: input, shape index: {}]
  %s4 = inlined_call_operand.vmem [shape: f32[1,128], index: 4, kind: input, shape index: {}]
  %s5 = inlined_call_operand.vmem [shape: f32[1,128], index: 5, kind: input, shape index: {}]
  %s6 = inlined_call_operand.vmem [shape: f32[3,3,1,128], index: 6, kind: input, shape index: {}]
  %s7 = inlined_call_operand.vmem [shape: f32[1,8,8,128], index: 7, kind: output, shape index: {}]
  %s8 = sld [smem:[#allocation0]]
  $region38: #{bn_relu_dwconv.1} parent=0
    _
  %s10 = ssub.s32 1, %s8
  %s11 = scalar_select 0, %s10, %s8
  // Predicated region
  $region2: #{bn_relu_dwconv.1} parent=0 // pred_check
    _
  $region3: #{bn_relu_dwconv.1} parent=0 // pred_check_branch
    %13 = sbr.rel (0) target = $region5
  $region4: #{bn_relu_dwconv.1} parent=0 // pred_region
    _
  $region5: #{bn_relu_dwconv.1} parent=0 // pred_fallthru
    _
  // Predicated region
  $region6: #{bn_relu_dwconv.1} parent=0 // pred_check
    _
  $region7: #{bn_relu_dwconv.1} parent=0 // pred_check_branch
    %15 = sbr.rel (0) target = $region9
  $region8: #{bn_relu_dwconv.1} parent=0 // pred_region
    _
  $region9: #{bn_relu_dwconv.1} parent=0 // pred_fallthru
    _
  // Predicated region
  $region10: #{bn_relu_dwconv.1} parent=0 // pred_check
    _
  $region11: #{bn_relu_dwconv.1} parent=0 // pred_check_branch
    %17 = sbr.rel (0) target = $region13
  $region12: #{bn_relu_dwconv.1} parent=0 // pred_region
    _
  $region13: #{bn_relu_dwconv.1} parent=0 // pred_fallthru
    _
  // Predicated region
  $region14: #{bn_relu_dwconv.1} parent=0 // pred_check
    _
  $region15: #{bn_relu_dwconv.1} parent=0 // pred_check_branch
    %19 = sbr.rel (0) target = $region17
  $region16: #{bn_relu_dwconv.1} parent=0 // pred_region
    _
  $region17: #{bn_relu_dwconv.1} parent=0 // pred_fallthru
    _
  // Predicated region
  $region18: #{bn_relu_dwconv.1} parent=0 // pred_check
    _
  $region19: #{bn_relu_dwconv.1} parent=0 // pred_check_branch
    %21 = sbr.rel (0) target = $region21
  $region20: #{bn_relu_dwconv.1} parent=0 // pred_region
    _
  $region21: #{bn_relu_dwconv.1} parent=0 // pred_fallthru
    _
  // Predicated region
  $region22: #{bn_relu_dwconv.1} parent=0 // pred_check
    _
  $region23: #{bn_relu_dwconv.1} parent=0 // pred_check_branch
    %23 = sbr.rel (0) target = $region25
  $region24: #{bn_relu_dwconv.1} parent=0 // pred_region
    _
  $region25: #{bn_relu_dwconv.1} parent=0 // pred_fallthru
    _
  // Predicated region
  $region26: #{bn_relu_dwconv.1} parent=0 // pred_check
    _
  $region27: #{bn_relu_dwconv.1} parent=0 // pred_check_branch
    %25 = sbr.rel (0) target = $region29
  $region28: #{bn_relu_dwconv.1} parent=0 // pred_region
    _
  $region29: #{bn_relu_dwconv.1} parent=0 // pred_fallthru
    _
  %v26 = vld [vmem:[%s0] sm:$0xff]
  %v27 = vld [vmem:[%s0 + $0x8] sm:$0xff]
  %v28 = vld [vmem:[%s0 + $0x10] sm:$0xff]
  %v29 = vld [vmem:[%s0 + $0x18] sm:$0xff]
  %v30 = vld [vmem:[%s0 + $0x20] sm:$0xff]
  %v31 = vld [vmem:[%s0 + $0x28] sm:$0xff]
  %v32 = vld [vmem:[%s0 + $0x30] sm:$0xff]
  %v33 = vld [vmem:[%s0 + $0x38] sm:$0xff]
  %v34 = vld [vmem:[%s1] sm:$0xff]
  %v35 = vld [vmem:[%s1 + $0x8] sm:$0xff]
  %v36 = vld [vmem:[%s1 + $0x10] sm:$0xff]
  %v37 = vld [vmem:[%s1 + $0x18] sm:$0xff]
  %v38 = vld [vmem:[%s1 + $0x20] sm:$0xff]
  %v39 = vld [vmem:[%s1 + $0x28] sm:$0xff]
  %v40 = vld [vmem:[%s1 + $0x30] sm:$0xff]
  %v41 = vld [vmem:[%s1 + $0x38] sm:$0xff]
  %v42 = vld [vmem:[%s2] sm:$0xff]
  %v43 = vld [vmem:[%s2 + $0x8] sm:$0xff]
  %v44 = vld [vmem:[%s2 + $0x10] sm:$0xff]
  %v45 = vld [vmem:[%s2 + $0x18] sm:$0xff]
  %v46 = vld [vmem:[%s2 + $0x20] sm:$0xff]
  %v47 = vld [vmem:[%s2 + $0x28] sm:$0xff]
  %v48 = vld [vmem:[%s2 + $0x30] sm:$0xff]
  %v49 = vld [vmem:[%s2 + $0x38] sm:$0xff]
  %v50 = vld [vmem:[%s3] sm:$0xff]
  %v51 = vld [vmem:[%s3 + $0x8] sm:$0xff]
  %v52 = vld [vmem:[%s3 + $0x10] sm:$0xff]
  %v53 = vld [vmem:[%s3 + $0x18] sm:$0xff]
  %v54 = vld [vmem:[%s3 + $0x20] sm:$0xff]
  %v55 = vld [vmem:[%s3 + $0x28] sm:$0xff]
  %v56 = vld [vmem:[%s3 + $0x30] sm:$0xff]
  %v57 = vld [vmem:[%s3 + $0x38] sm:$0xff]
  %v58 = vadd.f32 %v26, %v34
  %v59 = vadd.f32 %v27, %v35
  %v60 = vadd.f32 %v28, %v36
  %v61 = vadd.f32 %v29, %v37
  %v62 = vadd.f32 %v30, %v38
  %v63 = vadd.f32 %v31, %v39
  %v64 = vadd.f32 %v32, %v40
  %v65 = vadd.f32 %v33, %v41
  %v66 = vadd.f32 %v58, %v42
  %v67 = vadd.f32 %v59, %v43
  %v68 = vadd.f32 %v60, %v44
  %v69 = vadd.f32 %v61, %v45
  %v70 = vadd.f32 %v62, %v46
  %v71 = vadd.f32 %v63, %v47
  %v72 = vadd.f32 %v64, %v48
  %v73 = vadd.f32 %v65, %v49
  %v74 = vadd.f32 %v66, %v50
  %v75 = vadd.f32 %v67, %v51
  %v76 = vadd.f32 %v68, %v52
  %v77 = vadd.f32 %v69, %v53
  %v78 = vadd.f32 %v70, %v54
  %v79 = vadd.f32 %v71, %v55
  %v80 = vadd.f32 %v72, %v56
  %v81 = vadd.f32 %v73, %v57
  %v82 = vmul.f32 %v26, %v26
  %v83 = vmul.f32 %v27, %v27
  %v84 = vmul.f32 %v28, %v28
  %v85 = vmul.f32 %v29, %v29
  %v86 = vmul.f32 %v30, %v30
  %v87 = vmul.f32 %v31, %v31
  %v88 = vmul.f32 %v32, %v32
  %v89 = vmul.f32 %v33, %v33
  %v90 = vmul.f32 %v34, %v34
  %v91 = vmul.f32 %v35, %v35
  %v92 = vmul.f32 %v36, %v36
  %v93 = vmul.f32 %v37, %v37
  %v94 = vmul.f32 %v38, %v38
  %v95 = vmul.f32 %v39, %v39
  %v96 = vmul.f32 %v40, %v40
  %v97 = vmul.f32 %v41, %v41
  %v98 = vadd.f32 %v82, %v90
  %v99 = vadd.f32 %v83, %v91
  %v100 = vadd.f32 %v84, %v92
  %v101 = vadd.f32 %v85, %v93
  %v102 = vadd.f32 %v86, %v94
  %v103 = vadd.f32 %v87, %v95
  %v104 = vadd.f32 %v88, %v96
  %v105 = vadd.f32 %v89, %v97
  %v106 = vmul.f32 %v42, %v42
  %v107 = vmul.f32 %v43, %v43
  %v108 = vmul.f32 %v44, %v44
  %v109 = vmul.f32 %v45, %v45
  %v110 = vmul.f32 %v46, %v46
  %v111 = vmul.f32 %v47, %v47
  %v112 = vmul.f32 %v48, %v48
  %v113 = vmul.f32 %v49, %v49
  %v114 = vadd.f32 %v98, %v106
  %v115 = vadd.f32 %v99, %v107
  %v116 = vadd.f32 %v100, %v108
  %v117 = vadd.f32 %v101, %v109
  %v118 = vadd.f32 %v102, %v110
  %v119 = vadd.f32 %v103, %v111
  %v120 = vadd.f32 %v104, %v112
  %v121 = vadd.f32 %v105, %v113
  %v122 = vmul.f32 %v50, %v50
  %v123 = vmul.f32 %v51, %v51
  %v124 = vmul.f32 %v52, %v52
  %v125 = vmul.f32 %v53, %v53
  %v126 = vmul.f32 %v54, %v54
  %v127 = vmul.f32 %v55, %v55
  %v128 = vmul.f32 %v56, %v56
  %v129 = vmul.f32 %v57, %v57
  %v130 = vadd.f32 %v114, %v122
  %v131 = vadd.f32 %v115, %v123
  %v132 = vadd.f32 %v116, %v124
  %v133 = vadd.f32 %v117, %v125
  %v134 = vadd.f32 %v118, %v126
  %v135 = vadd.f32 %v119, %v127
  %v136 = vadd.f32 %v120, %v128
  %v137 = vadd.f32 %v121, %v129
  %v138 = vadd.f32 %v74, %v75
  %v139 = vadd.f32 %v138, %v76
  %v140 = vadd.f32 %v139, %v77
  %v141 = vadd.f32 %v140, %v78
  %v142 = vadd.f32 %v141, %v79
  %v143 = vadd.f32 %v142, %v80
  %v144 = vadd.f32 %v143, %v81
  %v145 = vrot.slane %v144, 4
  %v146 = vadd.f32 %v144, %v145
  %v147 = vrot.slane %v146, 2
  %v148 = vadd.f32 %v146, %v147
  %v149 = vrot.slane %v148, 1
  %v150 = vadd.f32 %v148, %v149
  %v151 = vadd.f32 %v130, %v131
  %v152 = vadd.f32 %v151, %v132
  %v153 = vadd.f32 %v152, %v133
  %v154 = vadd.f32 %v153, %v134
  %v155 = vadd.f32 %v154, %v135
  %v156 = vadd.f32 %v155, %v136
  %v157 = vadd.f32 %v156, %v137
  %v158 = vrot.slane %v157, 4
  %v159 = vadd.f32 %v157, %v158
  %v160 = vrot.slane %v159, 2
  %v161 = vadd.f32 %v159, %v160
  %v162 = vrot.slane %v161, 1
  %v163 = vadd.f32 %v161, %v162
  %v164 = vrcp.pop 256.0
  %v165 = vmul.f32 %v150, %v164
  %v166 = vmul.f32 %v163, %v164
  %v167 = vmul.f32 %v165, %v165
  %v168 = vsub.f32 %v166, %v167
  %v169 = vmax.f32 %v168, 0.0
  %v170 = vld [vmem:[%s4] sm:$0x1]
  %v171 = vld [vmem:[%s5] sm:$0x1]
  %v172 = vadd.f32 %v169, 0.001
  %v173 = vrsqrt.pop %v172
  %v174 = vmul.f32 %v170, %v173
  %v175 = vmul.f32 %v165, %v174
  %v176 = vsub.f32 %v171, %v175
  %v178 = vlaneseq
  %v179 = vshrl.u32 %v178, 7
  %v180 = vsub.s32 0, %v179
  %v181 = vrot.slane %v174, %v180
  %v183 = vmul.f32 %v26, %v181
  %v184 = vmul.f32 %v27, %v181
  %v185 = vmul.f32 %v28, %v181
  %v186 = vmul.f32 %v29, %v181
  %v187 = vmul.f32 %v30, %v181
  %v188 = vmul.f32 %v31, %v181
  %v189 = vmul.f32 %v32, %v181
  %v190 = vmul.f32 %v33, %v181
  %v192 = vlaneseq
  %v193 = vshrl.u32 %v192, 7
  %v194 = vsub.s32 0, %v193
  %v195 = vrot.slane %v176, %v194
  %v197 = vadd.f32 %v183, %v195
  %v198 = vadd.f32 %v184, %v195
  %v199 = vadd.f32 %v185, %v195
  %v200 = vadd.f32 %v186, %v195
  %v201 = vadd.f32 %v187, %v195
  %v202 = vadd.f32 %v188, %v195
  %v203 = vadd.f32 %v189, %v195
  %v204 = vadd.f32 %v190, %v195
  %v205 = vmax.f32 %v197, 0.0
  %v206 = vmax.f32 %v198, 0.0
  %v207 = vmax.f32 %v199, 0.0
  %v208 = vmax.f32 %v200, 0.0
  %v209 = vmax.f32 %v201, 0.0
  %v210 = vmax.f32 %v202, 0.0
  %v211 = vmax.f32 %v203, 0.0
  %v212 = vmax.f32 %v204, 0.0
  %v213 = vmul.f32 %v34, %v181
  %v214 = vmul.f32 %v35, %v181
  %v215 = vmul.f32 %v36, %v181
  %v216 = vmul.f32 %v37, %v181
  %v217 = vmul.f32 %v38, %v181
  %v218 = vmul.f32 %v39, %v181
  %v219 = vmul.f32 %v40, %v181
  %v220 = vmul.f32 %v41, %v181
  %v221 = vadd.f32 %v213, %v195
  %v222 = vadd.f32 %v214, %v195
  %v223 = vadd.f32 %v215, %v195
  %v224 = vadd.f32 %v216, %v195
  %v225 = vadd.f32 %v217, %v195
  %v226 = vadd.f32 %v218, %v195
  %v227 = vadd.f32 %v219, %v195
  %v228 = vadd.f32 %v220, %v195
  %v229 = vmax.f32 %v221, 0.0
  %v230 = vmax.f32 %v222, 0.0
  %v231 = vmax.f32 %v223, 0.0
  %v232 = vmax.f32 %v224, 0.0
  %v233 = vmax.f32 %v225, 0.0
  %v234 = vmax.f32 %v226, 0.0
  %v235 = vmax.f32 %v227, 0.0
  %v236 = vmax.f32 %v228, 0.0
  %v237 = vmul.f32 %v42, %v181
  %v238 = vmul.f32 %v43, %v181
  %v239 = vmul.f32 %v44, %v181
  %v240 = vmul.f32 %v45, %v181
  %v241 = vmul.f32 %v46, %v181
  %v242 = vmul.f32 %v47, %v181
  %v243 = vmul.f32 %v48, %v181
  %v244 = vmul.f32 %v49, %v181
  %v245 = vadd.f32 %v237, %v195
  %v246 = vadd.f32 %v238, %v195
  %v247 = vadd.f32 %v239, %v195
  %v248 = vadd.f32 %v240, %v195
  %v249 = vadd.f32 %v241, %v195
  %v250 = vadd.f32 %v242, %v195
  %v251 = vadd.f32 %v243, %v195
  %v252 = vadd.f32 %v244, %v195
  %v253 = vmax.f32 %v245, 0.0
  %v254 = vmax.f32 %v246, 0.0
  %v255 = vmax.f32 %v247, 0.0
  %v256 = vmax.f32 %v248, 0.0
  %v257 = vmax.f32 %v249, 0.0
  %v258 = vmax.f32 %v250, 0.0
  %v259 = vmax.f32 %v251, 0.0
  %v260 = vmax.f32 %v252, 0.0
  %v261 = vmul.f32 %v50, %v181
  %v262 = vmul.f32 %v51, %v181
  %v263 = vmul.f32 %v52, %v181
  %v264 = vmul.f32 %v53, %v181
  %v265 = vmul.f32 %v54, %v181
  %v266 = vmul.f32 %v55, %v181
  %v267 = vmul.f32 %v56, %v181
  %v268 = vmul.f32 %v57, %v181
  %v269 = vadd.f32 %v261, %v195
  %v270 = vadd.f32 %v262, %v195
  %v271 = vadd.f32 %v263, %v195
  %v272 = vadd.f32 %v264, %v195
  %v273 = vadd.f32 %v265, %v195
  %v274 = vadd.f32 %v266, %v195
  %v275 = vadd.f32 %v267, %v195
  %v276 = vadd.f32 %v268, %v195
  %v277 = vmax.f32 %v269, 0.0
  %v278 = vmax.f32 %v270, 0.0
  %v279 = vmax.f32 %v271, 0.0
  %v280 = vmax.f32 %v272, 0.0
  %v281 = vmax.f32 %v273, 0.0
  %v282 = vmax.f32 %v274, 0.0
  %v283 = vmax.f32 %v275, 0.0
  %v284 = vmax.f32 %v276, 0.0
  %v285 = vlaneseq
  %v286 = vshrl.u32 %v285, 7
  %vm287 = vcmp.gt.s32.totalorder %v286, 0
  %v288 = vrot.slane %v229, 7
  %v289 = vrot.slane %v230, 7
  %v290 = vrot.slane %v231, 7
  %v291 = vrot.slane %v232, 7
  %v292 = vrot.slane %v233, 7
  %v293 = vrot.slane %v234, 7
  %v294 = vrot.slane %v235, 7
  %v295 = vrot.slane %v236, 7
  %v296 = vsel %vm287, 1, 0
  %vm297 = vcmp.eq.s32.totalorder %v296, 1
  %v298 = vsel %vm297, %v288, 0.0
  %v299 = vsel %vm297, %v289, 0.0
  %v300 = vsel %vm297, %v290, 0.0
  %v301 = vsel %vm297, %v291, 0.0
  %v302 = vsel %vm297, %v292, 0.0
  %v303 = vsel %vm297, %v293, 0.0
  %v304 = vsel %vm297, %v294, 0.0
  %v305 = vsel %vm297, %v295, 0.0
  %v306 = vrot.slane %v277, 7
  %v307 = vrot.slane %v278, 7
  %v308 = vrot.slane %v279, 7
  %v309 = vrot.slane %v280, 7
  %v310 = vrot.slane %v281, 7
  %v311 = vrot.slane %v282, 7
  %v312 = vrot.slane %v283, 7
  %v313 = vrot.slane %v284, 7
  %v314 = vsel %vm297, %v306, 0.0
  %v315 = vsel %vm297, %v307, 0.0
  %v316 = vsel %vm297, %v308, 0.0
  %v317 = vsel %vm297, %v309, 0.0
  %v318 = vsel %vm297, %v310, 0.0
  %v319 = vsel %vm297, %v311, 0.0
  %v320 = vsel %vm297, %v312, 0.0
  %v321 = vsel %vm297, %v313, 0.0
  %v322 = vld [vmem:[%s6] sm:$0x1]
  %v323 = vld [vmem:[%s6 + $0x1] sm:$0x1]
  %v324 = vld [vmem:[%s6 + $0x2] sm:$0x1]
  %v325 = vld [vmem:[%s6 + $0x3] sm:$0x1]
  %v326 = vld [vmem:[%s6 + $0x4] sm:$0x1]
  %v327 = vld [vmem:[%s6 + $0x5] sm:$0x1]
  %v328 = vld [vmem:[%s6 + $0x6] sm:$0x1]
  %v329 = vld [vmem:[%s6 + $0x7] sm:$0x1]
  %v330 = vld [vmem:[%s6 + $0x8] sm:$0x1]
  %v332 = vlaneseq
  %v333 = vshrl.u32 %v332, 7
  %v334 = vsub.s32 0, %v333
  %v335 = vrot.slane %v326, %v334
  %v337 = vmul.f32 %v205, %v335
  %v338 = vmul.f32 %v206, %v335
  %v339 = vmul.f32 %v207, %v335
  %v340 = vmul.f32 %v208, %v335
  %v341 = vmul.f32 %v209, %v335
  %v342 = vmul.f32 %v210, %v335
  %v343 = vmul.f32 %v211, %v335
  %v344 = vmul.f32 %v212, %v335
  %v346 = vlaneseq
  %v347 = vshrl.u32 %v346, 7
  %v348 = vsub.s32 0, %v347
  %v349 = vrot.slane %v327, %v348
  %v351 = vmul.f32 %v229, %v349
  %v352 = vmul.f32 %v230, %v349
  %v353 = vmul.f32 %v231, %v349
  %v354 = vmul.f32 %v232, %v349
  %v355 = vmul.f32 %v233, %v349
  %v356 = vmul.f32 %v234, %v349
  %v357 = vmul.f32 %v235, %v349
  %v358 = vmul.f32 %v236, %v349
  %v359 = vadd.f32 %v337, %v351
  %v360 = vadd.f32 %v338, %v352
  %v361 = vadd.f32 %v339, %v353
  %v362 = vadd.f32 %v340, %v354
  %v363 = vadd.f32 %v341, %v355
  %v364 = vadd.f32 %v342, %v356
  %v365 = vadd.f32 %v343, %v357
  %v366 = vadd.f32 %v344, %v358
  %v368 = vlaneseq
  %v369 = vshrl.u32 %v368, 7
  %v370 = vsub.s32 0, %v369
  %v371 = vrot.slane %v325, %v370
  %v373 = vmul.f32 %v298, %v371
  %v374 = vmul.f32 %v299, %v371
  %v375 = vmul.f32 %v300, %v371
  %v376 = vmul.f32 %v301, %v371
  %v377 = vmul.f32 %v302, %v371
  %v378 = vmul.f32 %v303, %v371
  %v379 = vmul.f32 %v304, %v371
  %v380 = vmul.f32 %v305, %v371
  %v381 = vadd.f32 %v359, %v373
  %v382 = vadd.f32 %v360, %v374
  %v383 = vadd.f32 %v361, %v375
  %v384 = vadd.f32 %v362, %v376
  %v385 = vadd.f32 %v363, %v377
  %v386 = vadd.f32 %v364, %v378
  %v387 = vadd.f32 %v365, %v379
  %v388 = vadd.f32 %v366, %v380
  %v390 = vlaneseq
  %v391 = vshrl.u32 %v390, 7
  %v392 = vsub.s32 0, %v391
  %v393 = vrot.slane %v329, %v392
  %v395 = vmul.f32 %v253, %v393
  %v396 = vmul.f32 %v254, %v393
  %v397 = vmul.f32 %v255, %v393
  %v398 = vmul.f32 %v256, %v393
  %v399 = vmul.f32 %v257, %v393
  %v400 = vmul.f32 %v258, %v393
  %v401 = vmul.f32 %v259, %v393
  %v402 = vmul.f32 %v260, %v393
  %v403 = vadd.f32 %v381, %v395
  %v404 = vadd.f32 %v382, %v396
  %v405 = vadd.f32 %v383, %v397
  %v406 = vadd.f32 %v384, %v398
  %v407 = vadd.f32 %v385, %v399
  %v408 = vadd.f32 %v386, %v400
  %v409 = vadd.f32 %v387, %v401
  %v410 = vadd.f32 %v388, %v402
  %v412 = vlaneseq
  %v413 = vshrl.u32 %v412, 7
  %v414 = vsub.s32 0, %v413
  %v415 = vrot.slane %v330, %v414
  %v417 = vmul.f32 %v277, %v415
  %v418 = vmul.f32 %v278, %v415
  %v419 = vmul.f32 %v279, %v415
  %v420 = vmul.f32 %v280, %v415
  %v421 = vmul.f32 %v281, %v415
  %v422 = vmul.f32 %v282, %v415
  %v423 = vmul.f32 %v283, %v415
  %v424 = vmul.f32 %v284, %v415
  %v425 = vadd.f32 %v403, %v417
  %v426 = vadd.f32 %v404, %v418
  %v427 = vadd.f32 %v405, %v419
  %v428 = vadd.f32 %v406, %v420
  %v429 = vadd.f32 %v407, %v421
  %v430 = vadd.f32 %v408, %v422
  %v431 = vadd.f32 %v409, %v423
  %v432 = vadd.f32 %v410, %v424
  %v434 = vlaneseq
  %v435 = vshrl.u32 %v434, 7
  %v436 = vsub.s32 0, %v435
  %v437 = vrot.slane %v328, %v436
  %v439 = vmul.f32 %v314, %v437
  %v440 = vmul.f32 %v315, %v437
  %v441 = vmul.f32 %v316, %v437
  %v442 = vmul.f32 %v317, %v437
  %v443 = vmul.f32 %v318, %v437
  %v444 = vmul.f32 %v319, %v437
  %v445 = vmul.f32 %v320, %v437
  %v446 = vmul.f32 %v321, %v437
  %v447 = vadd.f32 %v425, %v439
  %v448 = vadd.f32 %v426, %v440
  %v449 = vadd.f32 %v427, %v441
  %v450 = vadd.f32 %v428, %v442
  %v451 = vadd.f32 %v429, %v443
  %v452 = vadd.f32 %v430, %v444
  %v453 = vadd.f32 %v431, %v445
  %v454 = vadd.f32 %v432, %v446
  %v456 = vlaneseq
  %v457 = vshrl.u32 %v456, 7
  %v458 = vsub.s32 0, %v457
  %v459 = vrot.slane %v323, %v458
  %v461 = vmul.f32 %v253, %v459
  %v462 = vmul.f32 %v254, %v459
  %v463 = vmul.f32 %v255, %v459
  %v464 = vmul.f32 %v256, %v459
  %v465 = vmul.f32 %v257, %v459
  %v466 = vmul.f32 %v258, %v459
  %v467 = vmul.f32 %v259, %v459
  %v469 = vlaneseq
  %v470 = vshrl.u32 %v469, 7
  %v471 = vsub.s32 0, %v470
  %v472 = vrot.slane %v324, %v471
  %v474 = vmul.f32 %v277, %v472
  %v475 = vmul.f32 %v278, %v472
  %v476 = vmul.f32 %v279, %v472
  %v477 = vmul.f32 %v280, %v472
  %v478 = vmul.f32 %v281, %v472
  %v479 = vmul.f32 %v282, %v472
  %v480 = vmul.f32 %v283, %v472
  %v481 = vadd.f32 %v461, %v474
  %v482 = vadd.f32 %v462, %v475
  %v483 = vadd.f32 %v463, %v476
  %v484 = vadd.f32 %v464, %v477
  %v485 = vadd.f32 %v465, %v478
  %v486 = vadd.f32 %v466, %v479
  %v487 = vadd.f32 %v467, %v480
  %v489 = vlaneseq
  %v490 = vshrl.u32 %v489, 7
  %v491 = vsub.s32 0, %v490
  %v492 = vrot.slane %v322, %v491
  %v494 = vmul.f32 %v314, %v492
  %v495 = vmul.f32 %v315, %v492
  %v496 = vmul.f32 %v316, %v492
  %v497 = vmul.f32 %v317, %v492
  %v498 = vmul.f32 %v318, %v492
  %v499 = vmul.f32 %v319, %v492
  %v500 = vmul.f32 %v320, %v492
  %v501 = vadd.f32 %v481, %v494
  %v502 = vadd.f32 %v482, %v495
  %v503 = vadd.f32 %v483, %v496
  %v504 = vadd.f32 %v484, %v497
  %v505 = vadd.f32 %v485, %v498
  %v506 = vadd.f32 %v486, %v499
  %v507 = vadd.f32 %v487, %v500
  %508 = vst [vmem:[%s7] sm:$0xff] %v447
  %v509 = vadd.f32 %v448, %v501
  %v510 = vadd.f32 %v449, %v502
  %v511 = vadd.f32 %v450, %v503
  %v512 = vadd.f32 %v451, %v504
  %v513 = vadd.f32 %v452, %v505
  %v514 = vadd.f32 %v453, %v506
  %v515 = vadd.f32 %v454, %v507
  %s516 = scalar_lea.vmem %s7, 8
  %517 = vst [vmem:[%s516] sm:$0xff] %v509
  %518 = vst [vmem:[%s516 + $0x8] sm:$0xff] %v510
  %519 = vst [vmem:[%s516 + $0x10] sm:$0xff] %v511
  %520 = vst [vmem:[%s516 + $0x18] sm:$0xff] %v512
  %521 = vst [vmem:[%s516 + $0x20] sm:$0xff] %v513
  %522 = vst [vmem:[%s516 + $0x28] sm:$0xff] %v514
  %523 = vst [vmem:[%s516 + $0x30] sm:$0xff] %v515
  // Predicated region
  $region30: #{bn_relu_dwconv.1} parent=0 // pred_check
    _
  $region31: #{bn_relu_dwconv.1} parent=0 // pred_check_branch
    %525 = sbr.rel (0) target = $region33
  $region32: #{bn_relu_dwconv.1} parent=0 // pred_region
    _
  $region33: #{bn_relu_dwconv.1} parent=0 // pred_fallthru
    _
  // Predicated region
  $region34: #{bn_relu_dwconv.1} parent=0 // pred_check
    _
  $region35: #{bn_relu_dwconv.1} parent=0 // pred_check_branch
    %527 = sbr.rel (0) target = $region37
  $region36: #{bn_relu_dwconv.1} parent=0 // pred_region
    _
  $region37: #{bn_relu_dwconv.1} parent=0 // pred_fallthru
    _

</llo_original>
